<compile_context>
chip_gen: v5e
topology: v5e:2x2
jax: 0.10.0
libtpu: 0.0.40
codegen_flags: <defaults>
</compile_context>

<pallas_src>
import jax
import jax.numpy as jnp
from jax.experimental import pallas as pl
from jax.experimental.pallas import tpu as pltpu


def _cdiv(a, b):
    return -(-a // b)


def _vmem_limit_bytes():
    """Generation-aware scoped-VMEM limit (~85% of physical VMEM)."""
    cap = 64 * 1024 * 1024                # conservative default (v7x: 64 MiB/TC)
    try:
        info = pltpu.get_tpu_info()
        cap = int(getattr(info, "vmem_capacity_bytes", cap))
    except Exception:                     # not on TPU / API change: keep default
        pass
    return int(cap * 0.85)


def _pick_row_tile(R, V, W, L, itemsize, vmem_limit, force_split):
    """Rows (= (n, c) pairs) per grid step.

    Sized so (x tile + out tile) double-buffered, plus A's two buffers, fit in
    ~75% of the scoped VMEM limit.  No artificial cap: the biggest tile that
    fits minimizes grid-step count and maximizes DMA size on all generations.
    """
    per_row = (W * L + V * L) * itemsize * 2          # x + out, 2 buffers each
    a_bytes = 2 * V * W * itemsize                    # resident A, 2 buffers
    budget = int(0.75 * vmem_limit) - a_bytes
    budget = max(budget, per_row)                     # always allow >= 1 row
    r_fit = max(1, budget // per_row)

    min_tiles = 2 if (force_split and R > 1) else 1   # v7x: feed both TCs
    n_tiles = max(min_tiles, _cdiv(R, r_fit))
    if force_split and n_tiles % 2 == 1 and n_tiles < R:
        n_tiles += 1                                  # even split across 2 TCs
    n_tiles = min(n_tiles, R)
    return _cdiv(R, n_tiles)


def _dnconv_kernel(a_ref, x_ref, o_ref):
    # a_ref: (V, W)   x_ref: (rows, W, L)   o_ref: (rows, V, L)
    rows = x_ref.shape[0]
    a = a_ref[...]                         # A resident in VMEM for this batch

    def body(r, carry):
        # One MXU matmul per (n, c) row, in native layout (no relayout).
        # OOB rows of a ragged last tile only pollute OOB output rows, whose
        # writeback Pallas masks.
        o_ref[r] = jnp.dot(
            a, x_ref[r], preferred_element_type=jnp.float32
        ).astype(o_ref.dtype)
        return carry

    jax.lax.fori_loop(0, rows, body, 0)


def dnconv(x, A, *, compute_dtype=None):
    """x: (N, C, W, L).  A: (V, W) or (N, V, W).  Returns (N, C, V, L)."""
    N, C, W, L = x.shape

    if A.ndim == 2:
        V, W_a = A.shape
        assert W_a == W, "contraction dim mismatch"
        B, R = 1, N * C
        A_b = A[None]                          # (1, V, W)        -- free
        x_b = x.reshape(1, N * C, W, L)        # leading-dim merge -- free
    elif A.ndim == 3:
        N_a, V, W_a = A.shape
        assert N_a == N, "batch mismatch between A and x"
        assert W_a == W, "contraction dim mismatch"
        B, R = N, C
        A_b = A                                # (N, V, W)
        x_b = x                                # native layout, no copy
    else:
        raise ValueError("A size error")

    out_dtype = x.dtype
    if compute_dtype is not None:              # optional bf16: halves input HBM
        x_b = x_b.astype(compute_dtype)
        A_b = A_b.astype(compute_dtype)
    elif A_b.dtype != x_b.dtype:
        A_b = A_b.astype(x_b.dtype)

    itemsize = jnp.dtype(x_b.dtype).itemsize
    vmem_limit = _vmem_limit_bytes()
    r_tile = _pick_row_tile(R, V, W, L, itemsize, vmem_limit,
                            force_split=(B == 1))
    n_tiles = _cdiv(R, r_tile)                 # ragged last tile: no padding

    cost = pl.CostEstimate(
        flops=2 * N * C * V * W * L,
        bytes_accessed=(N * C * W * L + N * C * V * L) * itemsize
        + A_b.size * jnp.dtype(A_b.dtype).itemsize,
        transcendentals=0,
    )

    out = pl.pallas_call(
        _dnconv_kernel,
        out_shape=jax.ShapeDtypeStruct((B, R, V, L), out_dtype),
        grid=(B, n_tiles),
        in_specs=[
            # A: constant block index over the row-tile axis -> stays resident
            # in VMEM, fetched once per adjacency batch.
            pl.BlockSpec((pl.Squeezed(), V, W), lambda b, j: (b, 0, 0)),
            # x: native (rows, W, L) tile; last two dims are full array dims,
            # so the (8, 128) constraint is satisfied for any W, L.
            pl.BlockSpec((pl.Squeezed(), r_tile, W, L),
                         lambda b, j: (b, j, 0, 0)),
        ],
        out_specs=pl.BlockSpec((pl.Squeezed(), r_tile, V, L),
                               lambda b, j: (b, j, 0, 0)),
        compiler_params=pltpu.CompilerParams(
            dimension_semantics=("parallel", "parallel"),
            vmem_limit_bytes=vmem_limit,
        ),
        cost_estimate=cost,
    )(A_b, x_b)

    if A.ndim == 2:
        out = out.reshape(N, C, V, L)          # leading-dim split -- free
    # 3-D A: out is already (N, C, V, L); torch .contiguous() is a no-op here.
    return out


if __name__ == "__main__":
    key = jax.random.PRNGKey(0)
    k1, k2, k3 = jax.random.split(key, 3)

    N, C, W, L = 2, 4, 16, 16   # batch, channels, num_nodes, seq_len
    V = W                       # adjacency is square over the node dim

    x = jax.random.normal(k1, (N, C, W, L), dtype=jnp.float32)
    A2 = jax.random.normal(k2, (V, W), dtype=jnp.float32)       # 2D adjacency
    A3 = jax.random.normal(k3, (N, V, W), dtype=jnp.float32)    # per-batch adjacency

    # 2D A case
    out2 = jax.block_until_ready(dnconv(x, A2))
    ref2 = jnp.einsum("vw,ncwl->ncvl", A2, x)
    assert out2.shape == (N, C, V, L)
    assert jnp.allclose(out2, ref2, atol=1e-5, rtol=1e-5)

    # 3D A case
    out3 = jax.block_until_ready(dnconv(x, A3))
    ref3 = jnp.einsum("nvw,ncwl->ncvl", A3, x)
    assert out3.shape == (N, C, V, L)
    assert jnp.allclose(out3, ref3, atol=1e-5, rtol=1e-5)

    print("KERNEL_OK")
</pallas_src>

<mosaic_0001>
module attributes {stable_mosaic.version = 11 : i64} {
  func.func @_dnconv_kernel(%arg0: i32, %arg1: i32, %arg2: memref<1x16x16xf32, #tpu.memory_space<vmem>>, %arg3: memref<1x4x16x16xf32, #tpu.memory_space<vmem>>, %arg4: memref<1x4x16x16xf32, #tpu.memory_space<vmem>>) attributes {dimension_semantics = [#tpu.dimension_semantics<parallel>, #tpu.dimension_semantics<parallel>], iteration_bounds = array<i64: 1, 2>, scalar_prefetch = 0 : i64, scratch_operands = 0 : i64, tpu.core_type = #tpu.core_type<tc>, window_params = [{transform_indices = @transform_0, window_bounds = array<i64: 1, 16, 16>}, {transform_indices = @transform_1, window_bounds = array<i64: 1, 4, 16, 16>}, {transform_indices = @transform_2, window_bounds = array<i64: 1, 4, 16, 16>}]} {
    %c0 = arith.constant 0 : index
    %c0_0 = arith.constant 0 : index
    %c0_1 = arith.constant 0 : index
    %0 = vector.load %arg2[%c0, %c0_0, %c0_1] : memref<1x16x16xf32, #tpu.memory_space<vmem>>, vector<1x16x16xf32>
    %1 = vector.shape_cast %0 : vector<1x16x16xf32> to vector<16x16xf32>
    %c0_i32 = arith.constant 0 : i32
    %c4_i32 = arith.constant 4 : i32
    %2 = arith.addi %c0_i32, %c4_i32 : i32
    %c1_i32 = arith.constant 1 : i32
    scf.for %arg5 = %c0_i32 to %2 step %c1_i32  : i32 {
      %c0_3 = arith.constant 0 : index
      %3 = arith.index_cast %arg5 : i32 to index
      %c0_4 = arith.constant 0 : index
      %c0_5 = arith.constant 0 : index
      %4 = vector.load %arg3[%c0_3, %3, %c0_4, %c0_5] : memref<1x4x16x16xf32, #tpu.memory_space<vmem>>, vector<1x1x16x16xf32>
      %5 = vector.shape_cast %4 : vector<1x1x16x16xf32> to vector<16x16xf32>
      %cst = arith.constant dense<0.000000e+00> : vector<16x16xf32>
      %6 = tpu.matmul %1, %5, %cst {dimension_numbers = #tpu.dot_dimension_numbers<[1], [0], [0], [1], [0, 0, 1, 1], [], []>} : vector<16x16xf32>, vector<16x16xf32>, vector<16x16xf32> -> vector<16x16xf32>
      %c0_6 = arith.constant 0 : index
      %7 = arith.index_cast %arg5 : i32 to index
      %c0_7 = arith.constant 0 : index
      %c0_8 = arith.constant 0 : index
      %8 = vector.load %arg4[%c0_6, %7, %c0_7, %c0_8] : memref<1x4x16x16xf32, #tpu.memory_space<vmem>>, vector<1x1x16x16xf32>
      %9 = vector.shape_cast %8 : vector<1x1x16x16xf32> to vector<16x16xf32>
      %10 = vector.shape_cast %6 : vector<16x16xf32> to vector<1x1x16x16xf32>
      tpu.vector_store %arg4[%c0_6, %7, %c0_7, %c0_8], %10 {strides = array<i32>} : memref<1x4x16x16xf32, #tpu.memory_space<vmem>>, vector<1x1x16x16xf32>,
    }
    %c4_i32_2 = arith.constant 4 : i32
    return
  }
  func.func @transform_0(%arg0: i32, %arg1: i32) -> (i32, i32, i32) {
    %c0_i32 = arith.constant 0 : i32
    %c0_i32_0 = arith.constant 0 : i32
    %c0_i32_1 = arith.constant 0 : i32
    return %arg0, %c0_i32, %c0_i32_0 : i32, i32, i32
  }
  func.func @transform_1(%arg0: i32, %arg1: i32) -> (i32, i32, i32, i32) {
    %c0_i32 = arith.constant 0 : i32
    %c0_i32_0 = arith.constant 0 : i32
    %c0_i32_1 = arith.constant 0 : i32
    return %arg0, %arg1, %c0_i32, %c0_i32_0 : i32, i32, i32, i32
  }
  func.func @transform_2(%arg0: i32, %arg1: i32) -> (i32, i32, i32, i32) {
    %c0_i32 = arith.constant 0 : i32
    %c0_i32_0 = arith.constant 0 : i32
    %c0_i32_1 = arith.constant 0 : i32
    return %arg0, %arg1, %c0_i32, %c0_i32_0 : i32, i32, i32, i32
  }
}

</mosaic_0001>

<llo_original>
// kernel: tpu_custom_call.1
$region0: #{tpu_custom_call.1}
  #allocation0 [shape = 'u32[]', space=smem, size = 0x4, offset = 0x4, fixed_abs, tag = 'smem constant byte address 0x4 - core index']
  #allocation1 [shape = 'u32[72,128]{1,0:T(1,128)}', space=vmem, size = 0x9000, scoped, tag = 'internal scratch']
  %s0 = inlined_call_operand.hbm [shape: f32[1,16,16], index: 0, kind: input, shape index: {}]
  %s1 = inlined_call_operand.hbm [shape: f32[1,8,16,16], index: 1, kind: input, shape index: {}]
  %s2 = inlined_call_operand.hbm [shape: f32[1,8,16,16], index: 2, kind: output, shape index: {}]
  %s3 = sld [smem:[#allocation0]]
  $region56: #{tpu_custom_call.1} parent=0
    _
  %s5 = ssub.s32 1, %s3
  %s6 = scalar_select 0, %s5, %s3
  $region1: #{tpu_custom_call.1} parent=0
    #allocation2 [shape = 'u8[8192]{0}', space=vmem, size = 0x2000, scoped, tag = 'input window, operand 0, single buffered']
    #allocation3 [shape = 's32[2]{0}', space=sflag, size = 0x8, scoped, tag = 'scoped memory for tpu_custom_call.1']
    #allocation4 [shape = 's32[2]{0}', space=sflag, size = 0x8, scoped, tag = 'scoped memory for tpu_custom_call.1']
    #allocation5 [shape = 'u8[65536]{0}', space=vmem, size = 0x10000, scoped, tag = 'input window, operand 1']
    #allocation6 [shape = 's32[2]{0}', space=sflag, size = 0x8, scoped, tag = 'scoped memory for tpu_custom_call.1']
    #allocation7 [shape = 'u8[65536]{0}', space=vmem, size = 0x10000, scoped, tag = 'output window, operand 0']
    %7 = vsyncpa [#allocation3], 0
    %8 = vsyncpa [#allocation6], 0
    %s9 = scalar_lea.sflag [#allocation6], 1
    %10 = vsyncpa %s9, 0
    %11 = vsyncpa [#allocation4], 0
    %s12 = scalar_lea.sflag [#allocation4], 1
    %13 = vsyncpa %s12, 0
    loop: start=0, step=1, limit=4
    $region2: #{tpu_custom_call.1} parent=1 // loop_pre_header
      _
    $region3: #{tpu_custom_call.1} parent=1 // loop_header
      %s15 = sphi 0, %s19
      %p16 = scmp.ge.s32.totalorder %s15, 4
      %s22 = sphi 0, %s34
      %s23 = sphi 0, %s30
      %s24 = sphi 0, %s22
      %s25 = sphi 0, %s23
      %s26 = sphi 0, %s24
      %s27 = sphi 0, %s25
      %s37 = sphi 0, %s39
      %s40 = sphi 0, %s37
      %s41 = sphi 0, %s40
      %s57 = sphi 0, %s41
      %s65 = sphi 0, %s67
      %s68 = sphi 0, %s65
      %s69 = sphi 0, %s68
      %s85 = sphi 0, %s69
      %s93 = sphi 0, %s95
      %s96 = sphi 0, %s93
      %s97 = sphi 0, %s96
      %s113 = sphi 0, %s97
    $region4: #{tpu_custom_call.1} parent=1 // loop_header_branch
      %18 = sbr.rel (%p16) target = $region8
    $region5: #{tpu_custom_call.1} parent=1 // loop_body
      %s20 = ssub.s32 %s15, 1
      %s21 = ssub.s32 %s15, 2
      %s28 = sadd.s32 1, %s23
      %p29 = scmp.ge.s32.totalorder %s28, 2
      %s30 = scalar_select %p29, 0, %s28
      %s31 = sadd.s32 1, %s22
      %s32 = scalar_select %p29, %s31, %s22
      %p33 = scmp.ge.s32.totalorder %s32, 1
      %s34 = scalar_select %p33, 0, %s32
      %s35 = ssub.s32 %s22, %s34
      %p36 = scmp.eq.s32.totalorder %s35, 0
      %s38 = sadd.s32 %s37, 1
      %s39 = scalar_select %p36, %s37, %s38
      %p42 = pneg %p36
      %p43 = scmp.eq.s32.totalorder %s15, 1
      %p44 = por %p42, %p43
      %p45 = scmp.ne.s32.totalorder %s37, %s40
      %p46 = scmp.eq.s32.totalorder %s15, 0
      %p47 = por %p45, %p46
      %p48 = scmp.ne.s32.totalorder %s37, %s40
      %p49 = scmp.eq.s32.totalorder %s20, 1
      %p50 = por %p48, %p49
      %p51 = scmp.ne.s32.totalorder %s40, %s41
      %p52 = scmp.eq.s32.totalorder %s20, 0
      %p53 = por %p51, %p52
      %p54 = scmp.ne.s32.totalorder %s40, %s41
      %p55 = scmp.eq.s32.totalorder %s21, 1
      %p56 = por %p54, %p55
      %p58 = scmp.ne.s32.totalorder %s41, %s57
      %p59 = scmp.eq.s32.totalorder %s21, 0
      %p60 = por %p58, %p59
      %s61 = ssub.s32 %s22, %s34
      %s62 = ssub.s32 %s23, %s30
      %s63 = sor.u32 %s61, %s62
      %p64 = scmp.eq.s32.totalorder %s63, 0
      %s66 = sadd.s32 %s65, 1
      %s67 = scalar_select %p64, %s65, %s66
      %p70 = pneg %p64
      %p71 = scmp.eq.s32.totalorder %s15, 1
      %p72 = por %p70, %p71
      %p73 = scmp.ne.s32.totalorder %s65, %s68
      %p74 = scmp.eq.s32.totalorder %s15, 0
      %p75 = por %p73, %p74
      %p76 = scmp.ne.s32.totalorder %s65, %s68
      %p77 = scmp.eq.s32.totalorder %s20, 1
      %p78 = por %p76, %p77
      %p79 = scmp.ne.s32.totalorder %s68, %s69
      %p80 = scmp.eq.s32.totalorder %s20, 0
      %p81 = por %p79, %p80
      %p82 = scmp.ne.s32.totalorder %s68, %s69
      %p83 = scmp.eq.s32.totalorder %s21, 1
      %p84 = por %p82, %p83
      %p86 = scmp.ne.s32.totalorder %s69, %s85
      %p87 = scmp.eq.s32.totalorder %s21, 0
      %p88 = por %p86, %p87
      %s89 = ssub.s32 %s22, %s34
      %s90 = ssub.s32 %s23, %s30
      %s91 = sor.u32 %s89, %s90
      %p92 = scmp.eq.s32.totalorder %s91, 0
      %s94 = sadd.s32 %s93, 1
      %s95 = scalar_select %p92, %s93, %s94
      %p98 = pneg %p92
      %p99 = scmp.eq.s32.totalorder %s15, 1
      %p100 = por %p98, %p99
      %p101 = scmp.ne.s32.totalorder %s93, %s96
      %p102 = scmp.eq.s32.totalorder %s15, 0
      %p103 = por %p101, %p102
      %p104 = scmp.ne.s32.totalorder %s93, %s96
      %p105 = scmp.eq.s32.totalorder %s20, 1
      %p106 = por %p104, %p105
      %p107 = scmp.ne.s32.totalorder %s96, %s97
      %p108 = scmp.eq.s32.totalorder %s20, 0
      %p109 = por %p107, %p108
      %p110 = scmp.ne.s32.totalorder %s96, %s97
      %p111 = scmp.eq.s32.totalorder %s21, 1
      %p112 = por %p110, %p111
      %p114 = scmp.ne.s32.totalorder %s97, %s113
      %p115 = scmp.eq.s32.totalorder %s21, 0
      %p116 = por %p114, %p115
      %p117 = scmp.le.s32.totalorder 1, %s15
      %p118 = scmp.lt.s32.totalorder %s15, 3
      %p119 = pnand %p117, %p118
      %p120 = pneg %p119
      // Predicated region
      $region9: #{tpu_custom_call.1} parent=5 // pred_check
        _
      $region10: #{tpu_custom_call.1} parent=5 // pred_check_branch
        %122 = sbr.rel (%p119) target = $region12
      $region11: #{tpu_custom_call.1} parent=5 // pred_region
        %s123 = ssub.s32 %s15, 1
        // Predicated region
        $region13: #{tpu_custom_call.1} parent=11 // pred_check
          %p124 = pneg %p53
        $region14: #{tpu_custom_call.1} parent=11 // pred_check_branch
          %126 = sbr.rel (%p124) target = $region16
        $region15: #{tpu_custom_call.1} parent=11 // pred_region
          %128 = vsyncadd [#allocation3], 0
          %s129 = smul.addr %s24, 2
          %s130 = smul.addr %s129, 8
          %s131 = scalar_lea.hbm %s0, %s130
          %s132 = sshll.u32 %s131, 4
          %s133 = int_to_ptr.hbm [resolvable:$true] %s132
          %s134 = sshll.u32 [#allocation2], 4
          %s135 = int_to_ptr.vmem [resolvable:$true] %s134
          %140 = dma.hbm_to_vmem [thread:$0]  %s133, 256, %s135, [#allocation3], 128, 128, 8
        $region16: #{tpu_custom_call.1} parent=11 // pred_fallthru
          _
      $region12: #{tpu_custom_call.1} parent=5 // pred_fallthru
        _
      %p141 = scmp.lt.s32.totalorder %s15, 2
      // Predicated region
      $region17: #{tpu_custom_call.1} parent=5 // pred_check
        %p142 = pneg %p141
      $region18: #{tpu_custom_call.1} parent=5 // pred_check_branch
        %144 = sbr.rel (%p142) target = $region20
      $region19: #{tpu_custom_call.1} parent=5 // pred_region
        // Predicated region
        $region21: #{tpu_custom_call.1} parent=19 // pred_check
          %p145 = pneg %p75
        $region22: #{tpu_custom_call.1} parent=19 // pred_check_branch
          %147 = sbr.rel (%p145) target = $region24
        $region23: #{tpu_custom_call.1} parent=19 // pred_region
          %s148 = sand.u32 %s65, 1
          %s149 = scalar_lea.sflag [#allocation6], %s148
          %s150 = sand.u32 %s65, 1
          %s151 = smul.addr %s150, 64
          %s152 = scalar_lea.vmem [#allocation5], %s151
          %s153 = smul.u32 4, %s23
          %155 = vsyncadd %s149, 0
          %s156 = smul.addr %s153, 2
          %s157 = smul.addr %s22, 16
          %s158 = sadd.s32 %s156, %s157
          %s159 = smul.addr %s158, 8
          %s160 = scalar_lea.hbm %s1, %s159
          %s161 = sshll.u32 %s160, 4
          %s162 = int_to_ptr.hbm [resolvable:$true] %s161
          %s163 = sshll.u32 %s152, 4
          %s164 = int_to_ptr.vmem [resolvable:$true] %s163
          %169 = dma.hbm_to_vmem [thread:$0]  %s162, 1024, %s164, %s149, 128, 128, 8
        $region24: #{tpu_custom_call.1} parent=19 // pred_fallthru
          _
      $region20: #{tpu_custom_call.1} parent=5 // pred_fallthru
        _
      %p170 = scmp.le.s32.totalorder 1, %s15
      %p171 = scmp.lt.s32.totalorder %s15, 3
      %p172 = pnand %p170, %p171
      %p173 = pneg %p172
      // Predicated region
      $region25: #{tpu_custom_call.1} parent=5 // pred_check
        _
      $region26: #{tpu_custom_call.1} parent=5 // pred_check_branch
        %175 = sbr.rel (%p172) target = $region28
      $region27: #{tpu_custom_call.1} parent=5 // pred_region
        %s176 = ssub.s32 %s15, 1
        // Predicated region
        $region29: #{tpu_custom_call.1} parent=27 // pred_check
          %p177 = pneg %p53
        $region30: #{tpu_custom_call.1} parent=27 // pred_check_branch
          %179 = sbr.rel (%p177) target = $region32
        $region31: #{tpu_custom_call.1} parent=27 // pred_region
          %181 = dma.done [#allocation3], 256
        $region32: #{tpu_custom_call.1} parent=27 // pred_fallthru
          _
        %s182 = sand.u32 %s68, 1
        %s183 = scalar_lea.sflag [#allocation6], %s182
        %s184 = sand.u32 %s68, 1
        %s185 = smul.addr %s184, 64
        %s186 = scalar_lea.vmem [#allocation5], %s185
        // Predicated region
        $region33: #{tpu_custom_call.1} parent=27 // pred_check
          %p187 = pneg %p81
        $region34: #{tpu_custom_call.1} parent=27 // pred_check_branch
          %189 = sbr.rel (%p187) target = $region36
        $region35: #{tpu_custom_call.1} parent=27 // pred_region
          %191 = dma.done %s183, 1024
        $region36: #{tpu_custom_call.1} parent=27 // pred_fallthru
          _
        %p192 = pneg %p53
        %p193 = pneg %p50
        %s194 = sand.u32 %s68, 1
        %s195 = scalar_lea.sflag [#allocation6], %s194
        %s196 = sand.u32 %s68, 1
        %s197 = smul.addr %s196, 64
        %s198 = scalar_lea.vmem [#allocation5], %s197
        %p199 = pneg %p81
        %p200 = pneg %p78
        %p201 = pneg %p109
        %p202 = pneg %p106
        %s203 = sand.u32 %s96, 1
        %s204 = scalar_lea.sflag [#allocation4], %s203
        %s205 = sand.u32 %s96, 1
        %s206 = smul.addr %s205, 64
        %s207 = scalar_lea.vmem [#allocation7], %s206
        %s208 = smul.u32 4, %s25
        %s209 = smul.u32 4, %s25
        %v210 = vld [vmem:[#allocation2] sm:$0xff]
        %v211 = vld [vmem:[#allocation2 + $0x8] sm:$0xff]
        loop: start=0, step=1, limit=4
        $region37: #{tpu_custom_call.1} parent=27 // loop_pre_header
          _
        $region38: #{tpu_custom_call.1} parent=27 // loop_header
          %s213 = sphi 0, %s217
          %p214 = scmp.ge.s32.totalorder %s213, 4
        $region39: #{tpu_custom_call.1} parent=27 // loop_header_branch
          %216 = sbr.rel (%p214) target = $region43
        $region40: #{tpu_custom_call.1} parent=27 // loop_body
          %s218 = smul.u32 %s213, 16
          %s219 = scalar_lea.vmem %s186, %s218 [#allocation5]
          %v220 = vld [vmem:[%s219] sm:$0xff]
          %v221 = vld [vmem:[%s219 + $0x8] sm:$0xff]
          %vm222 = vcmask 130048
          %v224 = vsel %vm222, %v210, 0
          %v227 = vsel %vm222, %v211, 0
          %229 = vmatpush.msra.mxu0 0.0
          %230 = vmatpush.msra.mxu0 0.0
          %231 = vmatpush.msra.mxu0 0.0
          %232 = vmatpush.msra.mxu0 0.0
          %233 = vmatpush.msra.mxu0 0.0
          %234 = vmatpush.msra.mxu0 0.0
          %235 = vmatpush.msra.mxu0 0.0
          %236 = vmatpush.msra.mxu0 0.0
          %237 = vmatpush.msra.mxu0 0.0
          %238 = vmatpush.msra.mxu0 0.0
          %239 = vmatpush.msra.mxu0 0.0
          %240 = vmatpush.msra.mxu0 0.0
          %241 = vmatpush.msra.mxu0 0.0
          %242 = vmatpush.msra.mxu0 0.0
          %243 = vmatpush.msra.mxu0 %v221
          %244 = vmatpush.msra.mxu0 %v220
          %245 = vmatmul.f32.gmra.mxu0 %v224
          %v246 = vpop.f32.mrf.mxu0
          %v247 = vadd.f32 0.0, %v246
          %248 = vmatmul.f32.gmra.mxu0 %v227
          %v249 = vpop.f32.mrf.mxu0
          %v250 = vadd.f32 0.0, %v249
          %251 = vdwg.mxu0
          %s252 = scalar_lea.vmem %s207, %s218 [#allocation7]
          %253 = vst.msk [vmem:[%s252] sm:$0xff] %vm222, %v247
          %254 = vst.msk [vmem:[%s252 + $0x8] sm:$0xff] %vm222, %v250
        $region41: #{tpu_custom_call.1} parent=27 // loop_footer
          %s217 = sadd.s32 1, %s213
        $region42: #{tpu_custom_call.1} parent=27 // loop_footer_branch
          %212 = sbr.rel target = $region38
        $region43: #{tpu_custom_call.1} parent=27 // loop_exit
          _
        %s255 = sand.u32 %s96, 1
        %s256 = scalar_lea.sflag [#allocation4], %s255
        %s257 = sand.u32 %s96, 1
        %s258 = smul.addr %s257, 64
        %s259 = scalar_lea.vmem [#allocation7], %s258
        // Predicated region
        $region44: #{tpu_custom_call.1} parent=27 // pred_check
          %p260 = pneg %p106
        $region45: #{tpu_custom_call.1} parent=27 // pred_check_branch
          %262 = sbr.rel (%p260) target = $region47
        $region46: #{tpu_custom_call.1} parent=27 // pred_region
          %s263 = smul.u32 4, %s25
          %265 = vsyncadd %s256, 0
          %s266 = smul.addr %s263, 2
          %s267 = smul.addr %s24, 16
          %s268 = sadd.s32 %s266, %s267
          %s269 = smul.addr %s268, 8
          %s270 = scalar_lea.hbm %s2, %s269
          %s271 = sshll.u32 %s259, 4
          %s272 = int_to_ptr.vmem [resolvable:$true] %s271
          %s273 = sshll.u32 %s270, 4
          %s274 = int_to_ptr.hbm [resolvable:$true] %s273
          %279 = dma.vmem_to_hbm [thread:$0]  %s272, 1024, %s274, %s256, 128, 128, 8
        $region47: #{tpu_custom_call.1} parent=27 // pred_fallthru
          _
      $region28: #{tpu_custom_call.1} parent=5 // pred_fallthru
        _
      %p280 = scmp.le.s32.totalorder 2, %s15
      // Predicated region
      $region48: #{tpu_custom_call.1} parent=5 // pred_check
        %p281 = pneg %p280
      $region49: #{tpu_custom_call.1} parent=5 // pred_check_branch
        %283 = sbr.rel (%p281) target = $region51
      $region50: #{tpu_custom_call.1} parent=5 // pred_region
        %s284 = ssub.s32 %s15, 2
        // Predicated region
        $region52: #{tpu_custom_call.1} parent=50 // pred_check
          %p285 = pneg %p112
        $region53: #{tpu_custom_call.1} parent=50 // pred_check_branch
          %287 = sbr.rel (%p285) target = $region55
        $region54: #{tpu_custom_call.1} parent=50 // pred_region
          %s288 = sand.u32 %s97, 1
          %s289 = scalar_lea.sflag [#allocation4], %s288
          %s290 = sand.u32 %s97, 1
          %s291 = smul.addr %s290, 64
          %s292 = scalar_lea.vmem [#allocation7], %s291
          %294 = dma.done %s289, 1024
        $region55: #{tpu_custom_call.1} parent=50 // pred_fallthru
          _
      $region51: #{tpu_custom_call.1} parent=5 // pred_fallthru
        _
    $region6: #{tpu_custom_call.1} parent=1 // loop_footer
      %s19 = sadd.s32 1, %s15
    $region7: #{tpu_custom_call.1} parent=1 // loop_footer_branch
      %14 = sbr.rel target = $region3
    $region8: #{tpu_custom_call.1} parent=1 // loop_exit
      _
    %295 = vsyncpa [#allocation3], 1
    %s296 = scalar_lea.sflag [#allocation3], 1
    %297 = vsyncpa %s296, 1
    %298 = vsyncpa [#allocation6], 1
    %s299 = scalar_lea.sflag [#allocation6], 1
    %300 = vsyncpa %s299, 1
    %301 = vsyncpa [#allocation4], 1
    %s302 = scalar_lea.sflag [#allocation4], 1
    %303 = vsyncpa %s302, 1

</llo_original>
